<compile_context>
chip_gen: v7x
topology: tpu7x:2x2x1
jax: 0.10.0
libtpu: 0.0.40
codegen_flags: <defaults>
</compile_context>

<pallas_src>
import functools

import jax
import jax.numpy as jnp
import numpy as np
from jax import lax
from jax.experimental import pallas as pl
from jax.experimental.pallas import tpu as pltpu


# TODO(synk): T5Tokenizer / pretrained T5 encoder (pretrained transformer) are
# not translatable to a Pallas kernel; their outputs are the inputs here.


def _round_up(x, m):
    return ((x + m - 1) // m) * m


def _vmem_capacity_bytes():
    """Physical VMEM of the current generation (128 MiB v5e/v6e, 64 MiB v7x)."""
    try:
        return int(pltpu.get_tpu_info().vmem_capacity_bytes)
    except Exception:
        return 64 << 20  # conservative fallback = v7x


def _choose_tiles(N_pad, S, D, hidden_itemsize, resident_bytes, vmem_cap):
    """Pick (tile_n, tile_s) for the hidden-state blocks.

    Budget = ~65% of physical VMEM minus resident weights/scratch/out block.
    Prefer full-S blocks with tile_n a multiple-of-8 divisor of N_pad (biggest
    that fits, capped so the N grid keeps a few steps for pipeline overlap).
    If even 8 rows x full S is too big (long sequences on v7x's 64 MiB), split
    the S axis instead.
    """
    budget = max(int(vmem_cap * 0.65) - resident_bytes, 2 << 20)
    lens_row = 128 * 4  # lane-padded (tile_n, 1) int32 row in VMEM

    def streamed(tn, ts):  # double-buffered streaming bytes per grid step
        return 2 * tn * (ts * D * hidden_itemsize + lens_row)

    # Keep a few N steps so the HBM pipeline has blocks to overlap.
    min_steps = min(4, max(N_pad // 8, 1))
    cap_n = max(8, ((N_pad // min_steps) // 8) * 8)

    t = cap_n
    while t >= 8:
        if N_pad % t == 0 and streamed(t, S) <= budget:
            return t, S
        t -= 8

    # Long-sequence fallback: tile_n = 8, split the sequence axis.
    tn = 8
    per_s_row = 2 * tn * D * hidden_itemsize
    ts = max(8, ((budget - 2 * tn * lens_row) // per_s_row) // 8 * 8)
    ts = min(ts, S)
    t = ts
    while t >= 8:  # prefer an exact divisor of S (deterministic, no ragged tail)
        if S % t == 0:
            return tn, t
        t -= 8
    return tn, ts  # ragged last S-block: OOB garbage is excluded by the mask


# ---------------------------------------------------------------------------
# Fused kernel: masked mean pooling (over S) + edit diff + fc_edit_encoder MLP
#   embeddings[n] = sum_{s < len[n]} hidden[n, s] / max(len[n], 1)
#   Da = emb[:B] - emb[B:2B]; Db = emb[2B:3B] - emb[3B:]
#   out = tanh([Da;Db] @ W1 + b1) @ W2 + b2         (written once, lane-dense)
# ---------------------------------------------------------------------------
def fused_cer_kernel(hidden_ref, lens_ref, w1_ref, b1_ref, w2_ref, b2_ref,
                     out_ref, emb_ref, acc_ref, *, batch_size):
    i = pl.program_id(0)                      # N-tile index
    s = pl.program_id(1)                      # S-tile index (reduction, last)
    n_last = pl.num_programs(0) - 1
    s_last = pl.num_programs(1) - 1
    tile_n, tile_s, _ = hidden_ref.shape

    @pl.when(s == 0)
    def _init_acc():
        acc_ref[...] = jnp.zeros_like(acc_ref)

    # bf16 (or f32) tile DMA'd from HBM; upcast in-register, accumulate in f32.
    hidden = hidden_ref[...].astype(jnp.float32)          # (tile_n, tile_s, D)
    lens = lens_ref[...]                                  # (tile_n, 1) int32

    # Rebuild the attention mask in-kernel: position < seq_len.
    # Select (not multiply) so any garbage in a ragged OOB S-block is excluded.
    pos = lax.broadcasted_iota(jnp.int32, (tile_n, tile_s, 1), 1) + s * tile_s
    valid = pos < lens[:, :, None]                        # (tile_n, tile_s, 1)
    acc_ref[...] += jnp.sum(jnp.where(valid, hidden, 0.0), axis=1)

    @pl.when(s == s_last)
    def _finalize_rows():
        # Exact divide (parity with the PyTorch model); zero-length guard.
        denom = jnp.maximum(lens.astype(jnp.float32), 1.0)      # (tile_n, 1)
        row0 = pl.multiple_of(i * tile_n, tile_n)
        emb_ref[pl.ds(row0, tile_n), :] = acc_ref[...] / denom

    @pl.when(jnp.logical_and(i == n_last, s == s_last))
    def _mlp_tail():
        B = batch_size
        e = emb_ref[...]                                   # (N_pad, D) f32
        da = e[0:B] - e[B:2 * B]                           # A1 - A2
        db = e[2 * B:3 * B] - e[3 * B:4 * B]               # B1 - B2
        x = jnp.concatenate([da, db], axis=0)              # (2B, D)
        h = jnp.tanh(
            jnp.dot(x, w1_ref[...], preferred_element_type=jnp.float32)
            + b1_ref[...]
        )
        out_ref[...] = (
            jnp.dot(h, w2_ref[...], preferred_element_type=jnp.float32)
            + b2_ref[...]
        )                                                  # (2B, C_pad) lane-dense


def _fused_cer_call(hidden, seq_lens, w1, b1, w2, b2, *, batch_size,
                    tile_n, tile_s, vmem_limit):
    N_pad, S, D = hidden.shape
    C_pad = w2.shape[1]
    R = 2 * batch_size
    grid = (N_pad // tile_n, pl.cdiv(S, tile_s))
    kernel = functools.partial(fused_cer_kernel, batch_size=batch_size)
    return pl.pallas_call(
        kernel,
        out_shape=jax.ShapeDtypeStruct((R, C_pad), jnp.float32),
        grid_spec=pltpu.PrefetchScalarGridSpec(
            num_scalar_prefetch=0,
            grid=grid,
            in_specs=[
                pl.BlockSpec((tile_n, tile_s, D), lambda i, s: (i, s, 0)),
                pl.BlockSpec((tile_n, 1), lambda i, s: (i, 0)),
                # resident weights (constant index -> DMA'd once)
                pl.BlockSpec((D, D), lambda i, s: (0, 0)),
                pl.BlockSpec((1, D), lambda i, s: (0, 0)),
                pl.BlockSpec((D, C_pad), lambda i, s: (0, 0)),
                pl.BlockSpec((1, C_pad), lambda i, s: (0, 0)),
            ],
            # constant index -> resident, written back once at grid end
            out_specs=pl.BlockSpec((R, C_pad), lambda i, s: (0, 0)),
            scratch_shapes=[
                pltpu.VMEM((N_pad, D), jnp.float32),   # pooled embeddings
                pltpu.VMEM((tile_n, D), jnp.float32),  # S-reduction accumulator
            ],
        ),
        compiler_params=pltpu.CompilerParams(
            # N axis carries the resident embeddings scratch (and the fused MLP
            # tail reads all of it), S axis is a reduction -> both "arbitrary".
            dimension_semantics=("arbitrary", "arbitrary"),
            vmem_limit_bytes=vmem_limit,
        ),
    )(hidden, seq_lens, w1, b1, w2, b2)


# ---------------------------------------------------------------------------
# Model wrapper (mirrors CustomCERModel.get_embeddings + forward)
# ---------------------------------------------------------------------------
def custom_cer_forward(last_hidden_state, attention_mask, params,
                       *, tile_n=None, tile_s=None):
    N, S, D = last_hidden_state.shape
    assert N % 4 == 0, "forward expects 4*batch_size sequences (A1,A2,B1,B2)"
    B = N // 4

    # Only per-sequence lengths go to the kernel (no (N,S,1) mask tensor).
    seq_lens = attention_mask.astype(jnp.int32).sum(axis=1)[:, None]   # (N, 1)

    # Pad N to a multiple of 8 (padded rows: len=0 -> pool to 0, never read).
    N_pad = _round_up(N, 8)
    hidden = last_hidden_state
    if N_pad != N:
        hidden = jnp.pad(hidden, ((0, N_pad - N), (0, 0), (0, 0)))
        seq_lens = jnp.pad(seq_lens, ((0, N_pad - N), (0, 0)))

    # fc_edit_encoder params; pad the final layer so the output store is
    # lane-dense (multiple of 128 lanes).  Standard T5 d_model (512/768/1024)
    # is already a multiple of 128; D is left as-is (padding the big hidden
    # tensor in the wrapper would cost more HBM traffic than it saves).
    w1 = params["w1"]
    b1 = params["b1"].reshape(1, D)
    C = params["w2"].shape[1]
    C_pad = _round_up(C, 128)
    w2 = params["w2"]
    b2 = params["b2"].reshape(1, C)
    if C_pad != C:
        w2 = jnp.pad(w2, ((0, 0), (0, C_pad - C)))
        b2 = jnp.pad(b2, ((0, 0), (0, C_pad - C)))

    itemsize = jnp.dtype(hidden.dtype).itemsize
    vmem_cap = _vmem_capacity_bytes()
    resident = (N_pad * D * 4            # embeddings scratch
                + D * D * 4 + D * 4      # w1, b1
                + D * C_pad * 4 + C_pad * 4  # w2, b2
                + 2 * B * C_pad * 4)     # output block
    auto_tn, auto_ts = _choose_tiles(N_pad, S, D, itemsize, resident, vmem_cap)
    tile_n = auto_tn if tile_n is None else tile_n
    tile_s = auto_ts if tile_s is None else tile_s
    assert N_pad % tile_n == 0

    resident += tile_n * D * 4                               # acc scratch
    streamed = 2 * tile_n * (tile_s * D * itemsize + 128 * 4)
    need = resident + streamed + (4 << 20)
    vmem_limit = int(min(max(need, 32 << 20), int(vmem_cap * 0.9)))

    out = _fused_cer_call(hidden, seq_lens, w1, b1, w2, b2, batch_size=B,
                          tile_n=tile_n, tile_s=tile_s, vmem_limit=vmem_limit)
    out = out[:, :C]
    return out[:B], out[B:]


# Pure-JAX reference for correctness check (starts from the same bf16 hidden)
def reference_forward(last_hidden_state, attention_mask, params):
    hidden = last_hidden_state.astype(jnp.float32)
    mask = attention_mask.astype(jnp.float32)
    masked = hidden * mask[:, :, None]
    lens = jnp.maximum(mask.sum(axis=1, keepdims=True), 1.0)
    emb = masked.sum(axis=1) / lens
    b = emb.shape[0] // 4
    Da = emb[:b] - emb[b:2 * b]
    Db = emb[2 * b:3 * b] - emb[3 * b:]
    X = jnp.concatenate([Da, Db], axis=0)
    h = jnp.tanh(X @ params["w1"] + params["b1"].reshape(1, -1))
    out = h @ params["w2"] + params["b2"].reshape(1, -1)
    return out[:b], out[b:]


if __name__ == "__main__":
    # Small, module-consistent shapes:
    #   batch_size = 4 -> 16 sequences, seq len = 16, d_model = 32,
    #   code_change_vector_size = 16
    batch_size = 4
    N = 4 * batch_size
    S = 16
    D = 32        # embedding_size (d_model)
    C = 16        # configs['code_change_vector_size']

    key = jax.random.PRNGKey(0)
    k_h, k_w1, k_b1, k_w2, k_b2 = jax.random.split(key, 5)

    # Encoder output in its native bf16 (DMA'd as bf16, upcast in-kernel).
    last_hidden_state = jax.random.normal(
        k_h, (N, S, D), dtype=jnp.float32
    ).astype(jnp.bfloat16)

    # Variable-length attention masks (each sequence has >= 2 real tokens).
    lens = np.array(
        [16, 9, 5, 12, 7, 4, 3, 16, 11, 2, 6, 5, 13, 4, 16, 3], dtype=np.int32
    )[:N]
    attention_mask = (np.arange(S)[None, :] < lens[:, None]).astype(np.int32)
    attention_mask = jnp.asarray(attention_mask)

    # fc_edit_encoder params: Linear(D, D) -> Tanh -> Linear(D, C)
    params = {
        "w1": jax.random.normal(k_w1, (D, D), dtype=jnp.float32) * 0.1,
        "b1": jax.random.normal(k_b1, (1, D), dtype=jnp.float32) * 0.1,
        "w2": jax.random.normal(k_w2, (D, C), dtype=jnp.float32) * 0.1,
        "b2": jax.random.normal(k_b2, (1, C), dtype=jnp.float32) * 0.1,
    }

    # Path 1: auto-tiled (full-S blocks, 2-step N grid -> pipelined DMA,
    #         fused MLP on the last step).
    Da_fc, Db_fc = custom_cer_forward(last_hidden_state, attention_mask, params)
    # Path 2: forced S-split (tile_s=8 -> 2 reduction steps) to exercise the
    #         long-sequence / v7x accumulator path.
    Da_fc2, Db_fc2 = custom_cer_forward(
        last_hidden_state, attention_mask, params, tile_n=8, tile_s=8
    )
    Da_fc, Db_fc, Da_fc2, Db_fc2 = jax.block_until_ready(
        (Da_fc, Db_fc, Da_fc2, Db_fc2)
    )

    Da_ref, Db_ref = reference_forward(last_hidden_state, attention_mask, params)
    assert Da_fc.shape == (batch_size, C) and Db_fc.shape == (batch_size, C)
    for got_a, got_b in ((Da_fc, Db_fc), (Da_fc2, Db_fc2)):
        np.testing.assert_allclose(
            np.asarray(got_a), np.asarray(Da_ref), rtol=1e-3, atol=1e-3
        )
        np.testing.assert_allclose(
            np.asarray(got_b), np.asarray(Db_ref), rtol=1e-3, atol=1e-3
        )

    print("KERNEL_OK")
</pallas_src>

<mosaic_0001>
module attributes {stable_mosaic.version = 11 : i64} {
  func.func @fused_cer_kernel(%arg0: i32, %arg1: i32, %arg2: memref<8x16x32xbf16, #tpu.memory_space<vmem>>, %arg3: memref<8x1xi32, #tpu.memory_space<vmem>>, %arg4: memref<32x32xf32, #tpu.memory_space<vmem>>, %arg5: memref<1x32xf32, #tpu.memory_space<vmem>>, %arg6: memref<32x128xf32, #tpu.memory_space<vmem>>, %arg7: memref<1x128xf32, #tpu.memory_space<vmem>>, %arg8: memref<8x128xf32, #tpu.memory_space<vmem>>, %arg9: memref<16x32xf32, #tpu.memory_space<vmem>>, %arg10: memref<8x32xf32, #tpu.memory_space<vmem>>) attributes {dimension_semantics = [#tpu.dimension_semantics<arbitrary>, #tpu.dimension_semantics<arbitrary>], iteration_bounds = array<i64: 2, 1>, scalar_prefetch = 0 : i64, scratch_operands = 2 : i64, tpu.core_type = #tpu.core_type<tc>, window_params = [{transform_indices = @transform_0, window_bounds = array<i64: 8, 16, 32>}, {transform_indices = @transform_1, window_bounds = array<i64: 8, 1>}, {pipeline_mode = #tpu.pipeline_mode<synchronous>, transform_indices = @transform_2, window_bounds = array<i64: 32, 32>}, {pipeline_mode = #tpu.pipeline_mode<synchronous>, transform_indices = @transform_3, window_bounds = array<i64: 1, 32>}, {pipeline_mode = #tpu.pipeline_mode<synchronous>, transform_indices = @transform_4, window_bounds = array<i64: 32, 128>}, {pipeline_mode = #tpu.pipeline_mode<synchronous>, transform_indices = @transform_5, window_bounds = array<i64: 1, 128>}, {pipeline_mode = #tpu.pipeline_mode<synchronous>, transform_indices = @transform_6, window_bounds = array<i64: 8, 128>}]} {
    %c0_i32 = arith.constant 0 : i32
    %0 = arith.cmpi eq, %arg1, %c0_i32 : i32
    %1 = arith.extui %0 : i1 to i32
    %c0_i32_0 = arith.constant 0 : i32
    %2 = arith.cmpi ne, %1, %c0_i32_0 : i32
    scf.if %2 {
      %cst_14 = arith.constant 0.000000e+00 : f32
      %29 = vector.broadcast %cst_14 : f32 to vector<8x32xf32>
      %c0_15 = arith.constant 0 : index
      %c0_16 = arith.constant 0 : index
      %30 = vector.load %arg10[%c0_15, %c0_16] : memref<8x32xf32, #tpu.memory_space<vmem>>, vector<8x32xf32>
      tpu.vector_store %arg10[%c0_15, %c0_16], %29 {strides = array<i32>} : memref<8x32xf32, #tpu.memory_space<vmem>>, vector<8x32xf32>,
    } else {
    }
    %c0 = arith.constant 0 : index
    %c0_1 = arith.constant 0 : index
    %c0_2 = arith.constant 0 : index
    %3 = vector.load %arg2[%c0, %c0_1, %c0_2] : memref<8x16x32xbf16, #tpu.memory_space<vmem>>, vector<8x16x32xbf16>
    %4 = arith.extf %3 : vector<8x16x32xbf16> to vector<8x16x32xf32>
    %c0_3 = arith.constant 0 : index
    %c0_4 = arith.constant 0 : index
    %5 = vector.load %arg3[%c0_3, %c0_4] : memref<8x1xi32, #tpu.memory_space<vmem>>, vector<8x1xi32>
    %6 = tpu.iota {dimensions = array<i32: 1>} : vector<8x16x1xi32>
    %c16_i32 = arith.constant 16 : i32
    %7 = arith.muli %arg1, %c16_i32 : i32
    %8 = vector.broadcast %7 : i32 to vector<8x16x1xi32>
    %9 = arith.addi %6, %8 : vector<8x16x1xi32>
    %10 = vector.shape_cast %5 : vector<8x1xi32> to vector<8x1x1xi32>
    %11 = vector.broadcast %10 : vector<8x1x1xi32> to vector<8x16x1xi32>
    %12 = arith.cmpi slt, %9, %11 : vector<8x16x1xi32>
    %c0_5 = arith.constant 0 : index
    %c0_6 = arith.constant 0 : index
    %13 = vector.load %arg10[%c0_5, %c0_6] : memref<8x32xf32, #tpu.memory_space<vmem>>, vector<8x32xf32>
    %cst = arith.constant 0.000000e+00 : f32
    %14 = vector.shape_cast %12 : vector<8x16x1xi1> to vector<8x16x1xi1>
    %15 = vector.broadcast %14 : vector<8x16x1xi1> to vector<8x16x32xi1>
    %16 = vector.broadcast %cst : f32 to vector<8x16x32xf32>
    %17 = arith.select %15, %4, %16 : vector<8x16x32xi1>, vector<8x16x32xf32>
    %cst_7 = arith.constant dense<0.000000e+00> : vector<8x32xf32>
    %18 = vector.multi_reduction <add>, %17, %cst_7 [1] : vector<8x16x32xf32> to vector<8x32xf32>
    %19 = arith.addf %13, %18 : vector<8x32xf32>
    %c0_8 = arith.constant 0 : index
    %c0_9 = arith.constant 0 : index
    %20 = vector.load %arg10[%c0_8, %c0_9] : memref<8x32xf32, #tpu.memory_space<vmem>>, vector<8x32xf32>
    tpu.vector_store %arg10[%c0_8, %c0_9], %19 {strides = array<i32>} : memref<8x32xf32, #tpu.memory_space<vmem>>, vector<8x32xf32>,
    %c0_i32_10 = arith.constant 0 : i32
    %21 = arith.cmpi eq, %arg1, %c0_i32_10 : i32
    %22 = arith.extui %21 : i1 to i32
    %c0_i32_11 = arith.constant 0 : i32
    %23 = arith.cmpi ne, %22, %c0_i32_11 : i32
    scf.if %23 {
      %29 = arith.sitofp %5 : vector<8x1xi32> to vector<8x1xf32>
      %cst_14 = arith.constant 1.000000e+00 : f32
      %30 = vector.broadcast %cst_14 : f32 to vector<8x1xf32>
      %31 = arith.maximumf %29, %30 : vector<8x1xf32>
      %c8_i32 = arith.constant 8 : i32
      %32 = arith.muli %arg0, %c8_i32 : i32
      %33 = tpu.assume_multiple %32, 8 : i32
      %c0_15 = arith.constant 0 : index
      %c0_16 = arith.constant 0 : index
      %34 = vector.load %arg10[%c0_15, %c0_16] : memref<8x32xf32, #tpu.memory_space<vmem>>, vector<8x32xf32>
      %35 = vector.broadcast %31 : vector<8x1xf32> to vector<8x32xf32>
      %36 = arith.divf %34, %35 : vector<8x32xf32>
      %37 = arith.index_cast %33 : i32 to index
      %c0_17 = arith.constant 0 : index
      %38 = vector.load %arg9[%37, %c0_17] : memref<16x32xf32, #tpu.memory_space<vmem>>, vector<8x32xf32>
      tpu.vector_store %arg9[%37, %c0_17], %36 {strides = array<i32>} : memref<16x32xf32, #tpu.memory_space<vmem>>, vector<8x32xf32>,
    } else {
    }
    %c1_i32 = arith.constant 1 : i32
    %24 = arith.cmpi eq, %arg0, %c1_i32 : i32
    %c0_i32_12 = arith.constant 0 : i32
    %25 = arith.cmpi eq, %arg1, %c0_i32_12 : i32
    %26 = arith.andi %24, %25 : i1
    %27 = arith.extui %26 : i1 to i32
    %c0_i32_13 = arith.constant 0 : i32
    %28 = arith.cmpi ne, %27, %c0_i32_13 : i32
    scf.if %28 {
      %c0_14 = arith.constant 0 : index
      %c0_15 = arith.constant 0 : index
      %29 = vector.load %arg9[%c0_14, %c0_15] : memref<16x32xf32, #tpu.memory_space<vmem>>, vector<16x32xf32>
      %30 = vector.extract_strided_slice %29 {offsets = [0, 0], sizes = [4, 32], strides = [1, 1]} : vector<16x32xf32> to vector<4x32xf32>
      %31 = vector.extract_strided_slice %29 {offsets = [4, 0], sizes = [4, 32], strides = [1, 1]} : vector<16x32xf32> to vector<4x32xf32>
      %32 = arith.subf %30, %31 : vector<4x32xf32>
      %33 = vector.extract_strided_slice %29 {offsets = [8, 0], sizes = [4, 32], strides = [1, 1]} : vector<16x32xf32> to vector<4x32xf32>
      %34 = vector.extract_strided_slice %29 {offsets = [12, 0], sizes = [4, 32], strides = [1, 1]} : vector<16x32xf32> to vector<4x32xf32>
      %35 = arith.subf %33, %34 : vector<4x32xf32>
      %36 = tpu.concatenate %32, %35 in 0 : vector<4x32xf32>, vector<4x32xf32> -> vector<8x32xf32>
      %c0_16 = arith.constant 0 : index
      %c0_17 = arith.constant 0 : index
      %37 = vector.load %arg4[%c0_16, %c0_17] : memref<32x32xf32, #tpu.memory_space<vmem>>, vector<32x32xf32>
      %cst_18 = arith.constant dense<0.000000e+00> : vector<8x32xf32>
      %38 = tpu.matmul %36, %37, %cst_18 {dimension_numbers = #tpu.dot_dimension_numbers<[1], [0], [0], [1], [0, 0, 1, 1], [], []>} : vector<8x32xf32>, vector<32x32xf32>, vector<8x32xf32> -> vector<8x32xf32>
      %c0_19 = arith.constant 0 : index
      %c0_20 = arith.constant 0 : index
      %39 = vector.load %arg5[%c0_19, %c0_20] : memref<1x32xf32, #tpu.memory_space<vmem>>, vector<1x32xf32>
      %40 = vector.broadcast %39 : vector<1x32xf32> to vector<8x32xf32>
      %41 = arith.addf %38, %40 : vector<8x32xf32>
      %42 = math.tanh %41 : vector<8x32xf32>
      %c0_21 = arith.constant 0 : index
      %c0_22 = arith.constant 0 : index
      %43 = vector.load %arg6[%c0_21, %c0_22] : memref<32x128xf32, #tpu.memory_space<vmem>>, vector<32x128xf32>
      %cst_23 = arith.constant dense<0.000000e+00> : vector<8x128xf32>
      %44 = tpu.matmul %42, %43, %cst_23 {dimension_numbers = #tpu.dot_dimension_numbers<[1], [0], [0], [1], [0, 0, 1, 1], [], []>} : vector<8x32xf32>, vector<32x128xf32>, vector<8x128xf32> -> vector<8x128xf32>
      %c0_24 = arith.constant 0 : index
      %c0_25 = arith.constant 0 : index
      %45 = vector.load %arg7[%c0_24, %c0_25] : memref<1x128xf32, #tpu.memory_space<vmem>>, vector<1x128xf32>
      %46 = vector.broadcast %45 : vector<1x128xf32> to vector<8x128xf32>
      %47 = arith.addf %44, %46 : vector<8x128xf32>
      %c0_26 = arith.constant 0 : index
      %c0_27 = arith.constant 0 : index
      %48 = vector.load %arg8[%c0_26, %c0_27] : memref<8x128xf32, #tpu.memory_space<vmem>>, vector<8x128xf32>
      tpu.vector_store %arg8[%c0_26, %c0_27], %47 {strides = array<i32>} : memref<8x128xf32, #tpu.memory_space<vmem>>, vector<8x128xf32>,
    } else {
    }
    return
  }
  func.func @transform_0(%arg0: i32, %arg1: i32) -> (i32, i32, i32) {
    %c0_i32 = arith.constant 0 : i32
    %c0_i32_0 = arith.constant 0 : i32
    return %arg0, %arg1, %c0_i32 : i32, i32, i32
  }
  func.func @transform_1(%arg0: i32, %arg1: i32) -> (i32, i32) {
    %c0_i32 = arith.constant 0 : i32
    %c0_i32_0 = arith.constant 0 : i32
    return %arg0, %c0_i32 : i32, i32
  }
  func.func @transform_2(%arg0: i32, %arg1: i32) -> (i32, i32) {
    %c0_i32 = arith.constant 0 : i32
    %c0_i32_0 = arith.constant 0 : i32
    %c0_i32_1 = arith.constant 0 : i32
    return %c0_i32, %c0_i32_0 : i32, i32
  }
  func.func @transform_3(%arg0: i32, %arg1: i32) -> (i32, i32) {
    %c0_i32 = arith.constant 0 : i32
    %c0_i32_0 = arith.constant 0 : i32
    %c0_i32_1 = arith.constant 0 : i32
    return %c0_i32, %c0_i32_0 : i32, i32
  }
  func.func @transform_4(%arg0: i32, %arg1: i32) -> (i32, i32) {
    %c0_i32 = arith.constant 0 : i32
    %c0_i32_0 = arith.constant 0 : i32
    %c0_i32_1 = arith.constant 0 : i32
    return %c0_i32, %c0_i32_0 : i32, i32
  }
  func.func @transform_5(%arg0: i32, %arg1: i32) -> (i32, i32) {
    %c0_i32 = arith.constant 0 : i32
    %c0_i32_0 = arith.constant 0 : i32
    %c0_i32_1 = arith.constant 0 : i32
    return %c0_i32, %c0_i32_0 : i32, i32
  }
  func.func @transform_6(%arg0: i32, %arg1: i32) -> (i32, i32) {
    %c0_i32 = arith.constant 0 : i32
    %c0_i32_0 = arith.constant 0 : i32
    %c0_i32_1 = arith.constant 0 : i32
    return %c0_i32, %c0_i32_0 : i32, i32
  }
}

</mosaic_0001>

<llo_original>
// kernel: tpu_custom_call.1
$region0: #{tpu_custom_call.1}
  #allocation0 [shape = 'u32[]', space=smem, size = 0x4, offset = 0x4, fixed_abs, tag = 'smem constant byte address 0x4 - core index']
  #allocation1 [shape = 'u32[144,128]{1,0:T(1,128)}', space=vmem, size = 0x12000, scoped, tag = 'internal scratch']
  #allocation2 [shape = 'f32[16,32]{1,0:T(8,128)}', space=vmem, size = 0x2000, scoped, tag = 'scratch operand']
  #allocation3 [shape = 'f32[8,32]{1,0:T(8,128)}', space=vmem, size = 0x1000, scoped, tag = 'scratch operand']
  %s0 = inlined_call_operand.hbm [shape: bf16[16,16,32], index: 0, kind: input, shape index: {}]
  %s1 = inlined_call_operand.vmem [shape: s32[16,1], index: 1, kind: input, shape index: {}]
  %s2 = inlined_call_operand.hbm [shape: f32[32,32], index: 2, kind: input, shape index: {}]
  %s3 = inlined_call_operand.hbm [shape: f32[1,32], index: 3, kind: input, shape index: {}]
  %s4 = inlined_call_operand.vmem [shape: f32[32,128], index: 4, kind: input, shape index: {}]
  %s5 = inlined_call_operand.vmem [shape: f32[1,128], index: 5, kind: input, shape index: {}]
  %s6 = inlined_call_operand.hbm [shape: f32[8,128], index: 6, kind: output, shape index: {}]
  %s7 = sld [smem:[#allocation0]]
  $region81: #{tpu_custom_call.1} parent=0
    _
  %s9 = ssub.s32 1, %s7
  %s10 = scalar_select 0, %s9, %s7
  $region1: #{tpu_custom_call.1} parent=0
    #allocation4 [shape = 'u8[65536]{0}', space=vmem, size = 0x10000, scoped, tag = 'input window, operand 0']
    #allocation5 [shape = 's32[2]{0}', space=sflag, size = 0x8, scoped, tag = 'scoped memory for tpu_custom_call.1']
    #allocation6 [shape = 's32[2]{0}', space=sflag, size = 0x8, scoped, tag = 'scoped memory for tpu_custom_call.1']
    #allocation7 [shape = 'u8[16384]{0}', space=vmem, size = 0x4000, scoped, tag = 'input window, operand 2, single buffered']
    #allocation8 [shape = 's32[1]{0}', space=sflag, size = 0x4, scoped, tag = 'scoped memory for tpu_custom_call.1']
    #allocation9 [shape = 'u8[512]{0}', space=vmem, size = 0x400, scoped, tag = 'input window, operand 3, single buffered']
    #allocation10 [shape = 'u8[4096]{0}', space=vmem, size = 0x1000, scoped, tag = 'output window, operand 0, single buffered']
    %11 = vsyncpa [#allocation5], 0
    %s12 = scalar_lea.sflag [#allocation5], 1
    %13 = vsyncpa %s12, 0
    %14 = vsyncpa [#allocation8], 0
    %15 = vsyncpa [#allocation6], 0
    loop: start=0, step=1, limit=4
    $region2: #{tpu_custom_call.1} parent=1 // loop_pre_header
      _
    $region3: #{tpu_custom_call.1} parent=1 // loop_header
      %s17 = sphi 0, %s21
      %p18 = scmp.ge.s32.totalorder %s17, 4
      %s24 = sphi 0, %s36
      %s25 = sphi 0, %s32
      %s26 = sphi 0, %s24
      %s27 = sphi 0, %s25
      %s28 = sphi 0, %s26
      %s29 = sphi 0, %s27
      %s41 = sphi 0, %s43
      %s44 = sphi 0, %s41
      %s45 = sphi 0, %s44
      %s61 = sphi 0, %s45
      %s67 = sphi 0, %s69
      %s70 = sphi 0, %s67
      %s71 = sphi 0, %s70
      %s87 = sphi 0, %s71
      %s91 = sphi 0, %s91
      %s93 = sphi 0, %s91
      %s94 = sphi 0, %s93
      %s108 = sphi 0, %s94
      %s112 = sphi 0, %s112
      %s114 = sphi 0, %s112
      %s115 = sphi 0, %s114
      %s129 = sphi 0, %s115
      %s133 = sphi 0, %s133
      %s135 = sphi 0, %s133
      %s136 = sphi 0, %s135
      %s150 = sphi 0, %s136
      %s154 = sphi 0, %s154
      %s156 = sphi 0, %s154
      %s157 = sphi 0, %s156
      %s171 = sphi 0, %s157
      %s175 = sphi 0, %s175
      %s177 = sphi 0, %s175
      %s178 = sphi 0, %s177
      %s192 = sphi 0, %s178
    $region4: #{tpu_custom_call.1} parent=1 // loop_header_branch
      %20 = sbr.rel (%p18) target = $region8
    $region5: #{tpu_custom_call.1} parent=1 // loop_body
      %s22 = ssub.s32 %s17, 1
      %s23 = ssub.s32 %s17, 2
      %s30 = sadd.s32 1, %s25
      %p31 = scmp.ge.s32.totalorder %s30, 1
      %s32 = scalar_select %p31, 0, %s30
      %s33 = sadd.s32 1, %s24
      %s34 = scalar_select %p31, %s33, %s24
      %p35 = scmp.ge.s32.totalorder %s34, 2
      %s36 = scalar_select %p35, 0, %s34
      %s37 = ssub.s32 %s24, %s36
      %s38 = ssub.s32 %s25, %s32
      %s39 = sor.u32 %s37, %s38
      %p40 = scmp.eq.s32.totalorder %s39, 0
      %s42 = sadd.s32 %s41, 1
      %s43 = scalar_select %p40, %s41, %s42
      %p46 = pneg %p40
      %p47 = scmp.eq.s32.totalorder %s17, 1
      %p48 = por %p46, %p47
      %p49 = scmp.ne.s32.totalorder %s41, %s44
      %p50 = scmp.eq.s32.totalorder %s17, 0
      %p51 = por %p49, %p50
      %p52 = scmp.ne.s32.totalorder %s41, %s44
      %p53 = scmp.eq.s32.totalorder %s22, 1
      %p54 = por %p52, %p53
      %p55 = scmp.ne.s32.totalorder %s44, %s45
      %p56 = scmp.eq.s32.totalorder %s22, 0
      %p57 = por %p55, %p56
      %p58 = scmp.ne.s32.totalorder %s44, %s45
      %p59 = scmp.eq.s32.totalorder %s23, 1
      %p60 = por %p58, %p59
      %p62 = scmp.ne.s32.totalorder %s45, %s61
      %p63 = scmp.eq.s32.totalorder %s23, 0
      %p64 = por %p62, %p63
      %s65 = ssub.s32 %s24, %s36
      %p66 = scmp.eq.s32.totalorder %s65, 0
      %s68 = sadd.s32 %s67, 1
      %s69 = scalar_select %p66, %s67, %s68
      %p72 = pneg %p66
      %p73 = scmp.eq.s32.totalorder %s17, 1
      %p74 = por %p72, %p73
      %p75 = scmp.ne.s32.totalorder %s67, %s70
      %p76 = scmp.eq.s32.totalorder %s17, 0
      %p77 = por %p75, %p76
      %p78 = scmp.ne.s32.totalorder %s67, %s70
      %p79 = scmp.eq.s32.totalorder %s22, 1
      %p80 = por %p78, %p79
      %p81 = scmp.ne.s32.totalorder %s70, %s71
      %p82 = scmp.eq.s32.totalorder %s22, 0
      %p83 = por %p81, %p82
      %p84 = scmp.ne.s32.totalorder %s70, %s71
      %p85 = scmp.eq.s32.totalorder %s23, 1
      %p86 = por %p84, %p85
      %p88 = scmp.ne.s32.totalorder %s71, %s87
      %p89 = scmp.eq.s32.totalorder %s23, 0
      %p90 = por %p88, %p89
      %s92 = sadd.s32 %s91, 1
      %p95 = scmp.eq.s32.totalorder %s17, 1
      %p96 = scmp.ne.s32.totalorder %s91, %s93
      %p97 = scmp.eq.s32.totalorder %s17, 0
      %p98 = por %p96, %p97
      %p99 = scmp.ne.s32.totalorder %s91, %s93
      %p100 = scmp.eq.s32.totalorder %s22, 1
      %p101 = por %p99, %p100
      %p102 = scmp.ne.s32.totalorder %s93, %s94
      %p103 = scmp.eq.s32.totalorder %s22, 0
      %p104 = por %p102, %p103
      %p105 = scmp.ne.s32.totalorder %s93, %s94
      %p106 = scmp.eq.s32.totalorder %s23, 1
      %p107 = por %p105, %p106
      %p109 = scmp.ne.s32.totalorder %s94, %s108
      %p110 = scmp.eq.s32.totalorder %s23, 0
      %p111 = por %p109, %p110
      %s113 = sadd.s32 %s112, 1
      %p116 = scmp.eq.s32.totalorder %s17, 1
      %p117 = scmp.ne.s32.totalorder %s112, %s114
      %p118 = scmp.eq.s32.totalorder %s17, 0
      %p119 = por %p117, %p118
      %p120 = scmp.ne.s32.totalorder %s112, %s114
      %p121 = scmp.eq.s32.totalorder %s22, 1
      %p122 = por %p120, %p121
      %p123 = scmp.ne.s32.totalorder %s114, %s115
      %p124 = scmp.eq.s32.totalorder %s22, 0
      %p125 = por %p123, %p124
      %p126 = scmp.ne.s32.totalorder %s114, %s115
      %p127 = scmp.eq.s32.totalorder %s23, 1
      %p128 = por %p126, %p127
      %p130 = scmp.ne.s32.totalorder %s115, %s129
      %p131 = scmp.eq.s32.totalorder %s23, 0
      %p132 = por %p130, %p131
      %s134 = sadd.s32 %s133, 1
      %p137 = scmp.eq.s32.totalorder %s17, 1
      %p138 = scmp.ne.s32.totalorder %s133, %s135
      %p139 = scmp.eq.s32.totalorder %s17, 0
      %p140 = por %p138, %p139
      %p141 = scmp.ne.s32.totalorder %s133, %s135
      %p142 = scmp.eq.s32.totalorder %s22, 1
      %p143 = por %p141, %p142
      %p144 = scmp.ne.s32.totalorder %s135, %s136
      %p145 = scmp.eq.s32.totalorder %s22, 0
      %p146 = por %p144, %p145
      %p147 = scmp.ne.s32.totalorder %s135, %s136
      %p148 = scmp.eq.s32.totalorder %s23, 1
      %p149 = por %p147, %p148
      %p151 = scmp.ne.s32.totalorder %s136, %s150
      %p152 = scmp.eq.s32.totalorder %s23, 0
      %p153 = por %p151, %p152
      %s155 = sadd.s32 %s154, 1
      %p158 = scmp.eq.s32.totalorder %s17, 1
      %p159 = scmp.ne.s32.totalorder %s154, %s156
      %p160 = scmp.eq.s32.totalorder %s17, 0
      %p161 = por %p159, %p160
      %p162 = scmp.ne.s32.totalorder %s154, %s156
      %p163 = scmp.eq.s32.totalorder %s22, 1
      %p164 = por %p162, %p163
      %p165 = scmp.ne.s32.totalorder %s156, %s157
      %p166 = scmp.eq.s32.totalorder %s22, 0
      %p167 = por %p165, %p166
      %p168 = scmp.ne.s32.totalorder %s156, %s157
      %p169 = scmp.eq.s32.totalorder %s23, 1
      %p170 = por %p168, %p169
      %p172 = scmp.ne.s32.totalorder %s157, %s171
      %p173 = scmp.eq.s32.totalorder %s23, 0
      %p174 = por %p172, %p173
      %s176 = sadd.s32 %s175, 1
      %p179 = scmp.eq.s32.totalorder %s17, 1
      %p180 = scmp.ne.s32.totalorder %s175, %s177
      %p181 = scmp.eq.s32.totalorder %s17, 0
      %p182 = por %p180, %p181
      %p183 = scmp.ne.s32.totalorder %s175, %s177
      %p184 = scmp.eq.s32.totalorder %s22, 1
      %p185 = por %p183, %p184
      %p186 = scmp.ne.s32.totalorder %s177, %s178
      %p187 = scmp.eq.s32.totalorder %s22, 0
      %p188 = por %p186, %p187
      %p189 = scmp.ne.s32.totalorder %s177, %s178
      %p190 = scmp.eq.s32.totalorder %s23, 1
      %p191 = por %p189, %p190
      %p193 = scmp.ne.s32.totalorder %s178, %s192
      %p194 = scmp.eq.s32.totalorder %s23, 0
      %p195 = por %p193, %p194
      %p196 = scmp.le.s32.totalorder 1, %s17
      %p197 = scmp.lt.s32.totalorder %s17, 3
      %p198 = pnand %p196, %p197
      %p199 = pneg %p198
      // Predicated region
      $region9: #{tpu_custom_call.1} parent=5 // pred_check
        _
      $region10: #{tpu_custom_call.1} parent=5 // pred_check_branch
        %201 = sbr.rel (%p198) target = $region12
      $region11: #{tpu_custom_call.1} parent=5 // pred_region
        %s202 = ssub.s32 %s17, 1
        // Predicated region
        $region13: #{tpu_custom_call.1} parent=11 // pred_check
          %p203 = pneg %p104
        $region14: #{tpu_custom_call.1} parent=11 // pred_check_branch
          %205 = sbr.rel (%p203) target = $region16
        $region15: #{tpu_custom_call.1} parent=11 // pred_region
          %s207 = ssub.s32 512, 512
          %208 = vsyncadd [#allocation8], %s207
          %s209 = sshll.u32 [#allocation7], 4
          %s210 = int_to_ptr.vmem [resolvable:$true] %s209
          %215 = dma.hbm_to_vmem [thread:$0]  %s2, 512, %s210, [#allocation8], 128, 128, 8
        $region16: #{tpu_custom_call.1} parent=11 // pred_fallthru
          _
        // Predicated region
        $region17: #{tpu_custom_call.1} parent=11 // pred_check
          %p216 = pneg %p125
        $region18: #{tpu_custom_call.1} parent=11 // pred_check_branch
          %218 = sbr.rel (%p216) target = $region20
        $region19: #{tpu_custom_call.1} parent=11 // pred_region
          %s220 = ssub.s32 16, 16
          %221 = vsyncadd [#allocation8], %s220
          %s223 = sshll.u32 [#allocation9], 4
          %s224 = int_to_ptr.vmem [resolvable:$true] %s223
          %226 = dma.hbm_to_vmem [thread:$0]  %s3, 16, %s224, [#allocation8]
        $region20: #{tpu_custom_call.1} parent=11 // pred_fallthru
          _
        // Predicated region
        $region21: #{tpu_custom_call.1} parent=11 // pred_check
          %p227 = pneg %p146
        $region22: #{tpu_custom_call.1} parent=11 // pred_check_branch
          %229 = sbr.rel (%p227) target = $region24
        $region23: #{tpu_custom_call.1} parent=11 // pred_region
          _
        $region24: #{tpu_custom_call.1} parent=11 // pred_fallthru
          _
        // Predicated region
        $region25: #{tpu_custom_call.1} parent=11 // pred_check
          %p230 = pneg %p167
        $region26: #{tpu_custom_call.1} parent=11 // pred_check_branch
          %232 = sbr.rel (%p230) target = $region28
        $region27: #{tpu_custom_call.1} parent=11 // pred_region
          _
        $region28: #{tpu_custom_call.1} parent=11 // pred_fallthru
          _
      $region12: #{tpu_custom_call.1} parent=5 // pred_fallthru
        _
      %p233 = scmp.lt.s32.totalorder %s17, 2
      // Predicated region
      $region29: #{tpu_custom_call.1} parent=5 // pred_check
        %p234 = pneg %p233
      $region30: #{tpu_custom_call.1} parent=5 // pred_check_branch
        %236 = sbr.rel (%p234) target = $region32
      $region31: #{tpu_custom_call.1} parent=5 // pred_region
        // Predicated region
        $region33: #{tpu_custom_call.1} parent=31 // pred_check
          %p237 = pneg %p51
        $region34: #{tpu_custom_call.1} parent=31 // pred_check_branch
          %239 = sbr.rel (%p237) target = $region36
        $region35: #{tpu_custom_call.1} parent=31 // pred_region
          %s240 = sand.u32 %s41, 1
          %s241 = scalar_lea.sflag [#allocation5], %s240
          %s242 = sand.u32 %s41, 1
          %s243 = smul.addr %s242, 64
          %s244 = scalar_lea.vmem [#allocation4], %s243
          %s245 = smul.u32 8, %s24
          %s246 = smul.u32 2, %s25
          %s248 = ssub.s32 1024, 1024
          %249 = vsyncadd %s241, %s248
          %s250 = smul.addr %s245, 2
          %s251 = sadd.s32 %s246, %s250
          %s252 = smul.addr %s251, 64
          %s253 = scalar_lea.hbm %s0, %s252
          %s254 = sshll.u32 %s244, 4
          %s255 = int_to_ptr.vmem [resolvable:$true] %s254
          %260 = dma.hbm_to_vmem [thread:$0]  %s253, 1024, %s255, %s241, 64, 64, 4
        $region36: #{tpu_custom_call.1} parent=31 // pred_fallthru
          _
        // Predicated region
        $region37: #{tpu_custom_call.1} parent=31 // pred_check
          %p261 = pneg %p77
        $region38: #{tpu_custom_call.1} parent=31 // pred_check_branch
          %263 = sbr.rel (%p261) target = $region40
        $region39: #{tpu_custom_call.1} parent=31 // pred_region
          %p264 = scmp.lt.s32.totalorder %s24, 1
          %s265 = scalar_select %p264, %s24, 1
          %s266 = smul.addr %s265, 8
          %s267 = scalar_lea.vmem %s1, %s266
        $region40: #{tpu_custom_call.1} parent=31 // pred_fallthru
          _
      $region32: #{tpu_custom_call.1} parent=5 // pred_fallthru
        _
      %p268 = scmp.le.s32.totalorder 1, %s17
      %p269 = scmp.lt.s32.totalorder %s17, 3
      %p270 = pnand %p268, %p269
      %p271 = pneg %p270
      // Predicated region
      $region41: #{tpu_custom_call.1} parent=5 // pred_check
        _
      $region42: #{tpu_custom_call.1} parent=5 // pred_check_branch
        %273 = sbr.rel (%p270) target = $region44
      $region43: #{tpu_custom_call.1} parent=5 // pred_region
        %s274 = ssub.s32 %s17, 1
        %s275 = sand.u32 %s44, 1
        %s276 = scalar_lea.sflag [#allocation5], %s275
        %s277 = sand.u32 %s44, 1
        %s278 = smul.addr %s277, 64
        %s279 = scalar_lea.vmem [#allocation4], %s278
        // Predicated region
        $region45: #{tpu_custom_call.1} parent=43 // pred_check
          %p280 = pneg %p57
        $region46: #{tpu_custom_call.1} parent=43 // pred_check_branch
          %282 = sbr.rel (%p280) target = $region48
        $region47: #{tpu_custom_call.1} parent=43 // pred_region
          %283 = dma.done %s276, 1024
        $region48: #{tpu_custom_call.1} parent=43 // pred_fallthru
          _
        // Predicated region
        $region49: #{tpu_custom_call.1} parent=43 // pred_check
          %p284 = pneg %p104
        $region50: #{tpu_custom_call.1} parent=43 // pred_check_branch
          %286 = sbr.rel (%p284) target = $region52
        $region51: #{tpu_custom_call.1} parent=43 // pred_region
          %287 = dma.done [#allocation8], 512
        $region52: #{tpu_custom_call.1} parent=43 // pred_fallthru
          _
        // Predicated region
        $region53: #{tpu_custom_call.1} parent=43 // pred_check
          %p288 = pneg %p125
        $region54: #{tpu_custom_call.1} parent=43 // pred_check_branch
          %290 = sbr.rel (%p288) target = $region56
        $region55: #{tpu_custom_call.1} parent=43 // pred_region
          %291 = dma.done [#allocation8], 16
        $region56: #{tpu_custom_call.1} parent=43 // pred_fallthru
          _
        %s292 = sand.u32 %s44, 1
        %s293 = scalar_lea.sflag [#allocation5], %s292
        %s294 = sand.u32 %s44, 1
        %s295 = smul.addr %s294, 64
        %s296 = scalar_lea.vmem [#allocation4], %s295
        %p297 = pneg %p57
        %p298 = pneg %p54
        %p299 = scmp.lt.s32.totalorder %s26, 1
        %s300 = scalar_select %p299, %s26, 1
        %s301 = smul.addr %s300, 8
        %s302 = scalar_lea.vmem %s1, %s301
        %p303 = pneg %p83
        %p304 = pneg %p80
        %p305 = pneg %p104
        %p306 = pneg %p101
        %p307 = pneg %p125
        %p308 = pneg %p122
        %p309 = pneg %p146
        %p310 = pneg %p143
        %p311 = pneg %p167
        %p312 = pneg %p164
        %p313 = pneg %p188
        %p314 = pneg %p185
        %s315 = smul.u32 8, %s26
        %s316 = smul.u32 2, %s27
        %p317 = scmp.lt.s32.totalorder %s26, 1
        %s318 = scalar_select %p317, %s26, 1
        %s319 = smul.addr %s318, 8
        %s320 = scalar_lea.vmem %s1, %s319
        %p321 = scmp.eq.s32.totalorder %s27, 0
        // Predicated region
        $region57: #{tpu_custom_call.1} parent=43 // pred_check
          %p322 = pneg %p321
        $region58: #{tpu_custom_call.1} parent=43 // pred_check_branch
          %324 = sbr.rel (%p322) target = $region60
        $region59: #{tpu_custom_call.1} parent=43 // pred_region
          %vm325 = vcmask 261120
          %326 = vst.msk [vmem:[#allocation3] sm:$0xff] %vm325, 0.0
        $region60: #{tpu_custom_call.1} parent=43 // pred_fallthru
          _
        %v327 = vld [vmem:[%s279] sm:$0xf]
        %v328 = vld [vmem:[%s279 + $0x4] sm:$0xf]
        %v329 = vld [vmem:[%s279 + $0x8] sm:$0xf]
        %v330 = vld [vmem:[%s279 + $0xc] sm:$0xf]
        %v331 = vld [vmem:[%s279 + $0x10] sm:$0xf]
        %v332 = vld [vmem:[%s279 + $0x14] sm:$0xf]
        %v333 = vld [vmem:[%s279 + $0x18] sm:$0xf]
        %v334 = vld [vmem:[%s279 + $0x1c] sm:$0xf]
        %v335 = vld [vmem:[%s279 + $0x20] sm:$0xf]
        %v336 = vld [vmem:[%s279 + $0x24] sm:$0xf]
        %v337 = vld [vmem:[%s279 + $0x28] sm:$0xf]
        %v338 = vld [vmem:[%s279 + $0x2c] sm:$0xf]
        %v339 = vld [vmem:[%s279 + $0x30] sm:$0xf]
        %v340 = vld [vmem:[%s279 + $0x34] sm:$0xf]
        %v341 = vld [vmem:[%s279 + $0x38] sm:$0xf]
        %v342 = vld [vmem:[%s279 + $0x3c] sm:$0xf]
        %v343 = vunpack.c.l.bf16 %v327
        %v344 = vunpack.c.l.bf16 %v328
        %v345 = vunpack.c.l.bf16 %v329
        %v346 = vunpack.c.l.bf16 %v330
        %v347 = vunpack.c.l.bf16 %v331
        %v348 = vunpack.c.l.bf16 %v332
        %v349 = vunpack.c.l.bf16 %v333
        %v350 = vunpack.c.l.bf16 %v334
        %v351 = vunpack.c.l.bf16 %v335
        %v352 = vunpack.c.l.bf16 %v336
        %v353 = vunpack.c.l.bf16 %v337
        %v354 = vunpack.c.l.bf16 %v338
        %v355 = vunpack.c.l.bf16 %v339
        %v356 = vunpack.c.l.bf16 %v340
        %v357 = vunpack.c.l.bf16 %v341
        %v358 = vunpack.c.l.bf16 %v342
        %v359 = vld [vmem:[%s320] sm:$0xff]
        %v360 = vlaneseq
        %v361 = vshrl.u32 %v360, 7
        %v362 = vadd.s32 %v361, 8
        %s363 = smul.u32 %s27, 16
        %v364 = vstv %s363
        %v365 = vadd.s32 %v361, %v364
        %v366 = vadd.s32 %v362, %v364
        %v367 = vcombine.high %v359, %v359
        %v369 = vunpack.c.l.s4 1966171168
        %v370 = vunpack.c.0.s8 %v369
        %v371 = vlaneseq
        %v372 = vshrl.u32 %v371, 7
        %v373 = vsub.s32 %v370, %v372
        %v374 = vrot.slane %v359, %v373
        %v376 = vunpack.c.l.s4 1966171168
        %v377 = vunpack.c.0.s8 %v376
        %v378 = vlaneseq
        %v379 = vshrl.u32 %v378, 7
        %v380 = vsub.s32 %v377, %v379
        %v381 = vrot.slane %v367, %v380
        %v382 = vcombine.high %v374, %v374
        %v383 = vcombine.high %v381, %v381
        %v385 = vunpack.c.l.s4 1966171168
        %v386 = vunpack.c.0.s8 %v385
        %v387 = vlaneseq
        %v388 = vshrl.u32 %v387, 7
        %v389 = vsub.s32 %v386, %v388
        %v390 = vrot.slane %v374, %v389
        %v392 = vunpack.c.l.s4 1966171168
        %v393 = vunpack.c.0.s8 %v392
        %v394 = vlaneseq
        %v395 = vshrl.u32 %v394, 7
        %v396 = vsub.s32 %v393, %v395
        %v397 = vrot.slane %v381, %v396
        %v399 = vunpack.c.l.s4 1966171168
        %v400 = vunpack.c.0.s8 %v399
        %v401 = vlaneseq
        %v402 = vshrl.u32 %v401, 7
        %v403 = vsub.s32 %v400, %v402
        %v404 = vrot.slane %v382, %v403
        %v406 = vunpack.c.l.s4 1966171168
        %v407 = vunpack.c.0.s8 %v406
        %v408 = vlaneseq
        %v409 = vshrl.u32 %v408, 7
        %v410 = vsub.s32 %v407, %v409
        %v411 = vrot.slane %v383, %v410
        %v412 = vcombine.high %v390, %v390
        %v413 = vcombine.high %v397, %v397
        %v414 = vcombine.high %v404, %v404
        %v415 = vcombine.high %v411, %v411
        %v416 = vlaneseq
        %v417 = vshrl.u32 %v416, 7
        %v418 = vsub.s32 0, %v417
        %v419 = vrot.slane %v390, %v418
        %v420 = vlaneseq
        %v421 = vshrl.u32 %v420, 7
        %v422 = vsub.s32 0, %v421
        %v423 = vrot.slane %v404, %v422
        %v424 = vlaneseq
        %v425 = vshrl.u32 %v424, 7
        %v426 = vsub.s32 0, %v425
        %v427 = vrot.slane %v412, %v426
        %v428 = vlaneseq
        %v429 = vshrl.u32 %v428, 7
        %v430 = vsub.s32 0, %v429
        %v431 = vrot.slane %v414, %v430
        %v432 = vlaneseq
        %v433 = vshrl.u32 %v432, 7
        %v434 = vsub.s32 0, %v433
        %v435 = vrot.slane %v397, %v434
        %v436 = vlaneseq
        %v437 = vshrl.u32 %v436, 7
        %v438 = vsub.s32 0, %v437
        %v439 = vrot.slane %v411, %v438
        %v440 = vlaneseq
        %v441 = vshrl.u32 %v440, 7
        %v442 = vsub.s32 0, %v441
        %v443 = vrot.slane %v413, %v442
        %v444 = vlaneseq
        %v445 = vshrl.u32 %v444, 7
        %v446 = vsub.s32 0, %v445
        %v447 = vrot.slane %v415, %v446
        %vm448 = vcmp.lt.s32.totalorder %v365, %v419
        %vm449 = vcmp.lt.s32.totalorder %v366, %v419
        %vm450 = vcmp.lt.s32.totalorder %v365, %v423
        %vm451 = vcmp.lt.s32.totalorder %v366, %v423
        %vm452 = vcmp.lt.s32.totalorder %v365, %v427
        %vm453 = vcmp.lt.s32.totalorder %v366, %v427
        %vm454 = vcmp.lt.s32.totalorder %v365, %v431
        %vm455 = vcmp.lt.s32.totalorder %v366, %v431
        %vm456 = vcmp.lt.s32.totalorder %v365, %v435
        %vm457 = vcmp.lt.s32.totalorder %v366, %v435
        %vm458 = vcmp.lt.s32.totalorder %v365, %v439
        %vm459 = vcmp.lt.s32.totalorder %v366, %v439
        %vm460 = vcmp.lt.s32.totalorder %v365, %v443
        %vm461 = vcmp.lt.s32.totalorder %v366, %v443
        %vm462 = vcmp.lt.s32.totalorder %v365, %v447
        %vm463 = vcmp.lt.s32.totalorder %v366, %v447
        %v464 = vld [vmem:[#allocation3] sm:$0xff]
        %v465 = vsel %vm448, 1, 0
        %v466 = vsel %vm449, 1, 0
        %v467 = vsel %vm450, 1, 0
        %v468 = vsel %vm451, 1, 0
        %v469 = vsel %vm452, 1, 0
        %v470 = vsel %vm453, 1, 0
        %v471 = vsel %vm454, 1, 0
        %v472 = vsel %vm455, 1, 0
        %v473 = vsel %vm456, 1, 0
        %v474 = vsel %vm457, 1, 0
        %v475 = vsel %vm458, 1, 0
        %v476 = vsel %vm459, 1, 0
        %v477 = vsel %vm460, 1, 0
        %v478 = vsel %vm461, 1, 0
        %v479 = vsel %vm462, 1, 0
        %v480 = vsel %vm463, 1, 0
        %481 = vset.pattern.permute.xlu0 0
        %482 = vperm.xlu0 %481, %v465
        %v483 = vpop.permute.xlu0 %482
        %484 = vset.pattern.permute.xlu0 0
        %485 = vperm.xlu0 %484, %v466
        %v486 = vpop.permute.xlu0 %485
        %487 = vset.pattern.permute.xlu0 0
        %488 = vperm.xlu0 %487, %v467
        %v489 = vpop.permute.xlu0 %488
        %490 = vset.pattern.permute.xlu0 0
        %491 = vperm.xlu0 %490, %v468
        %v492 = vpop.permute.xlu0 %491
        %493 = vset.pattern.permute.xlu0 0
        %494 = vperm.xlu0 %493, %v469
        %v495 = vpop.permute.xlu0 %494
        %496 = vset.pattern.permute.xlu0 0
        %497 = vperm.xlu0 %496, %v470
        %v498 = vpop.permute.xlu0 %497
        %499 = vset.pattern.permute.xlu0 0
        %500 = vperm.xlu0 %499, %v471
        %v501 = vpop.permute.xlu0 %500
        %502 = vset.pattern.permute.xlu0 0
        %503 = vperm.xlu0 %502, %v472
        %v504 = vpop.permute.xlu0 %503
        %505 = vset.pattern.permute.xlu0 0
        %506 = vperm.xlu0 %505, %v473
        %v507 = vpop.permute.xlu0 %506
        %508 = vset.pattern.permute.xlu0 0
        %509 = vperm.xlu0 %508, %v474
        %v510 = vpop.permute.xlu0 %509
        %511 = vset.pattern.permute.xlu0 0
        %512 = vperm.xlu0 %511, %v475
        %v513 = vpop.permute.xlu0 %512
        %514 = vset.pattern.permute.xlu0 0
        %515 = vperm.xlu0 %514, %v476
        %v516 = vpop.permute.xlu0 %515
        %517 = vset.pattern.permute.xlu0 0
        %518 = vperm.xlu0 %517, %v477
        %v519 = vpop.permute.xlu0 %518
        %520 = vset.pattern.permute.xlu0 0
        %521 = vperm.xlu0 %520, %v478
        %v522 = vpop.permute.xlu0 %521
        %523 = vset.pattern.permute.xlu0 0
        %524 = vperm.xlu0 %523, %v479
        %v525 = vpop.permute.xlu0 %524
        %526 = vset.pattern.permute.xlu0 0
        %527 = vperm.xlu0 %526, %v480
        %v528 = vpop.permute.xlu0 %527
        %vm529 = vcmp.eq.s32.totalorder %v483, 1
        %vm530 = vcmp.eq.s32.totalorder %v486, 1
        %vm531 = vcmp.eq.s32.totalorder %v489, 1
        %vm532 = vcmp.eq.s32.totalorder %v492, 1
        %vm533 = vcmp.eq.s32.totalorder %v495, 1
        %vm534 = vcmp.eq.s32.totalorder %v498, 1
        %vm535 = vcmp.eq.s32.totalorder %v501, 1
        %vm536 = vcmp.eq.s32.totalorder %v504, 1
        %vm537 = vcmp.eq.s32.totalorder %v507, 1
        %vm538 = vcmp.eq.s32.totalorder %v510, 1
        %vm539 = vcmp.eq.s32.totalorder %v513, 1
        %vm540 = vcmp.eq.s32.totalorder %v516, 1
        %vm541 = vcmp.eq.s32.totalorder %v519, 1
        %vm542 = vcmp.eq.s32.totalorder %v522, 1
        %vm543 = vcmp.eq.s32.totalorder %v525, 1
        %vm544 = vcmp.eq.s32.totalorder %v528, 1
        %v545 = vsel %vm529, %v343, 0.0
        %v546 = vsel %vm530, %v344, 0.0
        %v547 = vsel %vm531, %v345, 0.0
        %v548 = vsel %vm532, %v346, 0.0
        %v549 = vsel %vm533, %v347, 0.0
        %v550 = vsel %vm534, %v348, 0.0
        %v551 = vsel %vm535, %v349, 0.0
        %v552 = vsel %vm536, %v350, 0.0
        %v553 = vsel %vm537, %v351, 0.0
        %v554 = vsel %vm538, %v352, 0.0
        %v555 = vsel %vm539, %v353, 0.0
        %v556 = vsel %vm540, %v354, 0.0
        %v557 = vsel %vm541, %v355, 0.0
        %v558 = vsel %vm542, %v356, 0.0
        %v559 = vsel %vm543, %v357, 0.0
        %v560 = vsel %vm544, %v358, 0.0
        %vm561 = vcmask 261120
        %v562 = vsel %vm561, %v545, 0.0
        %v563 = vsel %vm561, %v546, 0.0
        %v564 = vadd.f32 %v562, %v563
        %v565 = vrot.slane %v564, 4
        %v566 = vadd.f32 %v564, %v565
        %v567 = vrot.slane %v566, 2
        %v568 = vadd.f32 %v566, %v567
        %v569 = vrot.slane %v568, 1
        %v570 = vadd.f32 %v568, %v569
        %v571 = vsel %vm561, %v547, 0.0
        %v572 = vsel %vm561, %v548, 0.0
        %v573 = vadd.f32 %v571, %v572
        %v574 = vrot.slane %v573, 4
        %v575 = vadd.f32 %v573, %v574
        %v576 = vrot.slane %v575, 2
        %v577 = vadd.f32 %v575, %v576
        %v578 = vrot.slane %v577, 1
        %v579 = vadd.f32 %v577, %v578
        %v580 = vsel %vm561, %v549, 0.0
        %v581 = vsel %vm561, %v550, 0.0
        %v582 = vadd.f32 %v580, %v581
        %v583 = vrot.slane %v582, 4
        %v584 = vadd.f32 %v582, %v583
        %v585 = vrot.slane %v584, 2
        %v586 = vadd.f32 %v584, %v585
        %v587 = vrot.slane %v586, 1
        %v588 = vadd.f32 %v586, %v587
        %v589 = vsel %vm561, %v551, 0.0
        %v590 = vsel %vm561, %v552, 0.0
        %v591 = vadd.f32 %v589, %v590
        %v592 = vrot.slane %v591, 4
        %v593 = vadd.f32 %v591, %v592
        %v594 = vrot.slane %v593, 2
        %v595 = vadd.f32 %v593, %v594
        %v596 = vrot.slane %v595, 1
        %v597 = vadd.f32 %v595, %v596
        %v598 = vsel %vm561, %v553, 0.0
        %v599 = vsel %vm561, %v554, 0.0
        %v600 = vadd.f32 %v598, %v599
        %v601 = vrot.slane %v600, 4
        %v602 = vadd.f32 %v600, %v601
        %v603 = vrot.slane %v602, 2
        %v604 = vadd.f32 %v602, %v603
        %v605 = vrot.slane %v604, 1
        %v606 = vadd.f32 %v604, %v605
        %v607 = vsel %vm561, %v555, 0.0
        %v608 = vsel %vm561, %v556, 0.0
        %v609 = vadd.f32 %v607, %v608
        %v610 = vrot.slane %v609, 4
        %v611 = vadd.f32 %v609, %v610
        %v612 = vrot.slane %v611, 2
        %v613 = vadd.f32 %v611, %v612
        %v614 = vrot.slane %v613, 1
        %v615 = vadd.f32 %v613, %v614
        %v616 = vsel %vm561, %v557, 0.0
        %v617 = vsel %vm561, %v558, 0.0
        %v618 = vadd.f32 %v616, %v617
        %v619 = vrot.slane %v618, 4
        %v620 = vadd.f32 %v618, %v619
        %v621 = vrot.slane %v620, 2
        %v622 = vadd.f32 %v620, %v621
        %v623 = vrot.slane %v622, 1
        %v624 = vadd.f32 %v622, %v623
        %v625 = vsel %vm561, %v559, 0.0
        %v626 = vsel %vm561, %v560, 0.0
        %v627 = vadd.f32 %v625, %v626
        %v628 = vrot.slane %v627, 4
        %v629 = vadd.f32 %v627, %v628
        %v630 = vrot.slane %v629, 2
        %v631 = vadd.f32 %v629, %v630
        %v632 = vrot.slane %v631, 1
        %v633 = vadd.f32 %v631, %v632
        %vm642 = vcmask 1041409
        %v643 = vsel %vm642, %v579, %v570
        %vm644 = vcmask 1042434
        %v645 = vsel %vm644, %v588, %v643
        %vm646 = vcmask 1043459
        %v647 = vsel %vm646, %v597, %v645
        %vm648 = vcmask 1044484
        %v649 = vsel %vm648, %v606, %v647
        %vm650 = vcmask 1045509
        %v651 = vsel %vm650, %v615, %v649
        %vm652 = vcmask 1046534
        %v653 = vsel %vm652, %v624, %v651
        %vm654 = vcmask 1047559
        %v655 = vsel %vm654, %v633, %v653
        %v657 = vadd.f32 %v464, %v655
        %658 = vst.msk [vmem:[#allocation3] sm:$0xff] %vm561, %v657
        // Predicated region
        $region61: #{tpu_custom_call.1} parent=43 // pred_check
          %p659 = pneg %p321
        $region62: #{tpu_custom_call.1} parent=43 // pred_check_branch
          %661 = sbr.rel (%p659) target = $region64
        $region63: #{tpu_custom_call.1} parent=43 // pred_region
          %v662 = vcvt.s32.f32 %v359
          %v663 = vmax.f32 %v662, 1.0
          %s664 = smul.u32 %s26, 8
          %v665 = vld [vmem:[#allocation3] sm:$0xff]
          %667 = vset.pattern.permute.xlu0 0
          %668 = vperm.xlu0 %667, %v663
          %v669 = vpop.permute.xlu0 %668
          %v671 = vrcp.pop %v669
          %v672 = vmul.f32 %v665, %v671
          %s673 = scalar_lea.vmem [#allocation2], %s664
          %674 = vst.msk [vmem:[%s673] sm:$0xff] %vm561, %v672
        $region64: #{tpu_custom_call.1} parent=43 // pred_fallthru
          _
        %p675 = scmp.eq.s32.totalorder %s26, 1
        %p676 = pnand %p675, %p321
        %p677 = pneg %p676
        // Predicated region
        $region65: #{tpu_custom_call.1} parent=43 // pred_check
          _
        $region66: #{tpu_custom_call.1} parent=43 // pred_check_branch
          %679 = sbr.rel (%p676) target = $region68
        $region67: #{tpu_custom_call.1} parent=43 // pred_region
          %v680 = vld [vmem:[#allocation2] sm:$0xff]
          %v681 = vld [vmem:[#allocation2 + $0x8] sm:$0xff]
          %v683 = vrot.slane %v680, 4
          %v685 = vsub.f32 %v680, %v683
          %v687 = vrot.slane %v681, 4
          %v689 = vsub.f32 %v681, %v687
          %v691 = vrot.slane %v689, 4
          %vm693 = vcmask 1043456
          %v694 = vsel %vm693, %v685, %v691
          %v695 = vld [vmem:[#allocation7] sm:$0xff]
          %v696 = vld [vmem:[#allocation7 + $0x8] sm:$0xff]
          %v697 = vld [vmem:[#allocation7 + $0x10] sm:$0xff]
          %v698 = vld [vmem:[#allocation7 + $0x18] sm:$0xff]
          %v699 = vld [vmem:[#allocation9] sm:$0x1]
          %v701 = vlaneseq
          %v702 = vshrl.u32 %v701, 7
          %v703 = vsub.s32 0, %v702
          %v704 = vrot.slane %v699, %v703
          %v707 = vsel %vm561, %v694, 0
          %709 = vmatprep.subr.mxu0 0.0
          %710 = vmatpush1.msra.mxu0 %v695
          %711 = vmatprep.subr.mxu0 0.0
          %712 = vmatpush1.msra.mxu0 %v696
          %713 = vmatprep.subr.mxu0 0.0
          %714 = vmatpush1.msra.mxu0 %v697
          %715 = vmatprep.subr.mxu0 0.0
          %716 = vmatpush1.msra.mxu0 %v698
          %717 = vmatprep.subr.mxu0 0.0
          %718 = vmatpush1.msra.mxu0 0.0
          %719 = vmatprep.subr.mxu0 0.0
          %720 = vmatpush1.msra.mxu0 0.0
          %721 = vmatprep.subr.mxu0 0.0
          %722 = vmatpush1.msra.mxu0 0.0
          %723 = vmatprep.subr.mxu0 0.0
          %724 = vmatpush1.msra.mxu0 0.0
          %725 = vmatprep.subr.mxu0 0.0
          %726 = vmatpush1.msra.mxu0 0.0
          %727 = vmatprep.subr.mxu0 0.0
          %728 = vmatpush1.msra.mxu0 0.0
          %729 = vmatprep.subr.mxu0 0.0
          %730 = vmatpush1.msra.mxu0 0.0
          %731 = vmatprep.subr.mxu0 0.0
          %732 = vmatpush1.msra.mxu0 0.0
          %733 = vmatprep.subr.mxu0 0.0
          %734 = vmatpush1.msra.mxu0 0.0
          %735 = vmatprep.subr.mxu0 0.0
          %736 = vmatpush1.msra.mxu0 0.0
          %737 = vmatprep.subr.mxu0 0.0
          %738 = vmatpush1.msra.mxu0 0.0
          %739 = vmatprep.subr.mxu0 0.0
          %740 = vmatpush1.msra.mxu0 0.0
          %741 = vmatprep.subr.mxu0 0.0
          %742 = vmatpush1.msra.mxu0 0.0
          %743 = vmatprep.subr.mxu0 0.0
          %744 = vmatpush1.msra.mxu0 0.0
          %745 = vmatprep.subr.mxu0 0.0
          %746 = vmatpush1.msra.mxu0 0.0
          %747 = vmatprep.subr.mxu0 0.0
          %748 = vmatpush1.msra.mxu0 0.0
          %749 = vmatprep.subr.mxu0 0.0
          %750 = vmatpush1.msra.mxu0 0.0
          %751 = vmatprep.subr.mxu0 0.0
          %752 = vmatpush1.msra.mxu0 0.0
          %753 = vmatprep.subr.mxu0 0.0
          %754 = vmatpush1.msra.mxu0 0.0
          %755 = vmatprep.subr.mxu0 0.0
          %756 = vmatpush1.msra.mxu0 0.0
          %757 = vmatprep.subr.mxu0 0.0
          %758 = vmatpush1.msra.mxu0 0.0
          %759 = vmatprep.subr.mxu0 0.0
          %760 = vmatpush1.msra.mxu0 0.0
          %761 = vmatprep.subr.mxu0 0.0
          %762 = vmatpush1.msra.mxu0 0.0
          %763 = vmatprep.subr.mxu0 0.0
          %764 = vmatpush1.msra.mxu0 0.0
          %765 = vmatprep.subr.mxu0 0.0
          %766 = vmatpush1.msra.mxu0 0.0
          %767 = vmatprep.subr.mxu0 0.0
          %768 = vmatpush1.msra.mxu0 0.0
          %769 = vmatprep.subr.mxu0 0.0
          %770 = vmatpush1.msra.mxu0 0.0
          %771 = vmatprep.subr.mxu0 0.0
          %772 = vmatpush1.msra.mxu0 0.0
          %773 = vmatprep.mubr.f32.mxu0 0.0
          %774 = vmatmul.mubr.f32.gmra.mrb[0].mxu0 %v707
          %v775 = vpop.f32.mrb[0].mxu0
          %v776 = vadd.f32 %v704, %v775
          %v777 = vpop.f32.mrb[0].mxu0
          %778 = vdwg.mxu0
          %v779 = vtanh.pop %v776
          %v780 = vld [vmem:[%s4] sm:$0xff]
          %v781 = vld [vmem:[%s4 + $0x8] sm:$0xff]
          %v782 = vld [vmem:[%s4 + $0x10] sm:$0xff]
          %v783 = vld [vmem:[%s4 + $0x18] sm:$0xff]
          %v784 = vld [vmem:[%s5] sm:$0x1]
          %v786 = vlaneseq
          %v787 = vshrl.u32 %v786, 7
          %v788 = vsub.s32 0, %v787
          %v789 = vrot.slane %v784, %v788
          %v792 = vsel %vm561, %v779, 0
          %794 = vmatprep.subr.mxu0 0.0
          %795 = vmatpush1.msra.mxu0 %v780
          %796 = vmatprep.subr.mxu0 0.0
          %797 = vmatpush1.msra.mxu0 %v781
          %798 = vmatprep.subr.mxu0 0.0
          %799 = vmatpush1.msra.mxu0 %v782
          %800 = vmatprep.subr.mxu0 0.0
          %801 = vmatpush1.msra.mxu0 %v783
          %802 = vmatprep.subr.mxu0 0.0
          %803 = vmatpush1.msra.mxu0 0.0
          %804 = vmatprep.subr.mxu0 0.0
          %805 = vmatpush1.msra.mxu0 0.0
          %806 = vmatprep.subr.mxu0 0.0
          %807 = vmatpush1.msra.mxu0 0.0
          %808 = vmatprep.subr.mxu0 0.0
          %809 = vmatpush1.msra.mxu0 0.0
          %810 = vmatprep.subr.mxu0 0.0
          %811 = vmatpush1.msra.mxu0 0.0
          %812 = vmatprep.subr.mxu0 0.0
          %813 = vmatpush1.msra.mxu0 0.0
          %814 = vmatprep.subr.mxu0 0.0
          %815 = vmatpush1.msra.mxu0 0.0
          %816 = vmatprep.subr.mxu0 0.0
          %817 = vmatpush1.msra.mxu0 0.0
          %818 = vmatprep.subr.mxu0 0.0
          %819 = vmatpush1.msra.mxu0 0.0
          %820 = vmatprep.subr.mxu0 0.0
          %821 = vmatpush1.msra.mxu0 0.0
          %822 = vmatprep.subr.mxu0 0.0
          %823 = vmatpush1.msra.mxu0 0.0
          %824 = vmatprep.subr.mxu0 0.0
          %825 = vmatpush1.msra.mxu0 0.0
          %826 = vmatprep.subr.mxu0 0.0
          %827 = vmatpush1.msra.mxu0 0.0
          %828 = vmatprep.subr.mxu0 0.0
          %829 = vmatpush1.msra.mxu0 0.0
          %830 = vmatprep.subr.mxu0 0.0
          %831 = vmatpush1.msra.mxu0 0.0
          %832 = vmatprep.subr.mxu0 0.0
          %833 = vmatpush1.msra.mxu0 0.0
          %834 = vmatprep.subr.mxu0 0.0
          %835 = vmatpush1.msra.mxu0 0.0
          %836 = vmatprep.subr.mxu0 0.0
          %837 = vmatpush1.msra.mxu0 0.0
          %838 = vmatprep.subr.mxu0 0.0
          %839 = vmatpush1.msra.mxu0 0.0
          %840 = vmatprep.subr.mxu0 0.0
          %841 = vmatpush1.msra.mxu0 0.0
          %842 = vmatprep.subr.mxu0 0.0
          %843 = vmatpush1.msra.mxu0 0.0
          %844 = vmatprep.subr.mxu0 0.0
          %845 = vmatpush1.msra.mxu0 0.0
          %846 = vmatprep.subr.mxu0 0.0
          %847 = vmatpush1.msra.mxu0 0.0
          %848 = vmatprep.subr.mxu0 0.0
          %849 = vmatpush1.msra.mxu0 0.0
          %850 = vmatprep.subr.mxu0 0.0
          %851 = vmatpush1.msra.mxu0 0.0
          %852 = vmatprep.subr.mxu0 0.0
          %853 = vmatpush1.msra.mxu0 0.0
          %854 = vmatprep.subr.mxu0 0.0
          %855 = vmatpush1.msra.mxu0 0.0
          %856 = vmatprep.subr.mxu0 0.0
          %857 = vmatpush1.msra.mxu0 0.0
          %858 = vmatprep.mubr.f32.mxu0 0.0
          %859 = vmatmul.mubr.f32.gmra.mrb[0].mxu0 %v792
          %v860 = vpop.f32.mrb[0].mxu0
          %v861 = vadd.f32 %v789, %v860
          %v862 = vpop.f32.mrb[0].mxu0
          %863 = vdwg.mxu0
          %864 = vst [vmem:[#allocation10] sm:$0xff] %v861
        $region68: #{tpu_custom_call.1} parent=43 // pred_fallthru
          _
        // Predicated region
        $region69: #{tpu_custom_call.1} parent=43 // pred_check
          %p865 = pneg %p185
        $region70: #{tpu_custom_call.1} parent=43 // pred_check_branch
          %867 = sbr.rel (%p865) target = $region72
        $region71: #{tpu_custom_call.1} parent=43 // pred_region
          %s869 = ssub.s32 128, 128
          %870 = vsyncadd [#allocation6], %s869
          %s872 = sshll.u32 [#allocation10], 4
          %s873 = int_to_ptr.vmem [resolvable:$true] %s872
          %875 = dma.vmem_to_hbm [thread:$0]  %s873, 128, %s6, [#allocation6]
        $region72: #{tpu_custom_call.1} parent=43 // pred_fallthru
          _
        // Predicated region
        $region73: #{tpu_custom_call.1} parent=43 // pred_check
          %p876 = pneg %p185
        $region74: #{tpu_custom_call.1} parent=43 // pred_check_branch
          %878 = sbr.rel (%p876) target = $region76
        $region75: #{tpu_custom_call.1} parent=43 // pred_region
          %879 = dma.done [#allocation6], 128
        $region76: #{tpu_custom_call.1} parent=43 // pred_fallthru
          _
      $region44: #{tpu_custom_call.1} parent=5 // pred_fallthru
        _
      %p880 = scmp.le.s32.totalorder 2, %s17
      // Predicated region
      $region77: #{tpu_custom_call.1} parent=5 // pred_check
        %p881 = pneg %p880
      $region78: #{tpu_custom_call.1} parent=5 // pred_check_branch
        %883 = sbr.rel (%p881) target = $region80
      $region79: #{tpu_custom_call.1} parent=5 // pred_region
        %s884 = ssub.s32 %s17, 2
      $region80: #{tpu_custom_call.1} parent=5 // pred_fallthru
        _
    $region6: #{tpu_custom_call.1} parent=1 // loop_footer
      %s21 = sadd.s32 1, %s17
    $region7: #{tpu_custom_call.1} parent=1 // loop_footer_branch
      %16 = sbr.rel target = $region3
    $region8: #{tpu_custom_call.1} parent=1 // loop_exit
      _
    %885 = vsyncpa [#allocation5], 1
    %s886 = scalar_lea.sflag [#allocation5], 1
    %887 = vsyncpa %s886, 1
    %888 = vsyncpa [#allocation8], 1
    %889 = vsyncpa [#allocation6], 1
    %s890 = scalar_lea.sflag [#allocation6], 1
    %891 = vsyncpa %s890, 1

</llo_original>
